<compile_context>
chip_gen: v7x
topology: tpu7x:2x2x1
jax: 0.10.0
libtpu: 0.0.40
codegen_flags: <defaults>
</compile_context>

<pallas_src>
import jax
import jax.numpy as jnp
from jax.experimental import pallas as pl
from jax.experimental.pallas import tpu as pltpu

LANE = 128               # TPU lane width (last-dim tiling unit)
MAX_TB = 16384           # hard cap: keeps per-step VMEM temps well under 16 MiB
VMEM_LIMIT_BYTES = 32 * 1024 * 1024   # <= physical VMEM on v5e/v6e/v7x


def _mlp_kernel(x_ref, w1_ref, b1_ref, w2_ref, b2_ref, w3_ref, b3_ref, o_ref):
    # x_ref : (2, TB)   xᵀ tile (batch on lanes)
    # w1_ref: (H, 2)    w1ᵀ                       (f32)
    # b1_ref: (H, 1)                              (f32)
    # w2_ref: (H, H)    w2ᵀ                       (bf16 or f32 — MXU operand)
    # b2_ref: (H, 1)                              (f32)
    # w3_ref: (H, 1)    w3 column                 (f32, VPU operand)
    # b3_ref: (1, 1)    scalar bias in SMEM
    # o_ref : (1, TB)   yᵀ tile (lane-dense store)
    x0 = x_ref[0:1, :]                       # (1, TB)
    x1 = x_ref[1:2, :]                       # (1, TB)
    w1 = w1_ref[...]                         # (H, 2)

    # Layer 1: K=2 contraction as broadcast FMAs on the VPU (MXU skipped).
    h1 = jnp.tanh(w1[:, 0:1] * x0 + w1[:, 1:2] * x1 + b1_ref[...])      # (H, TB) f32

    # Layer 2: the only real matmul. Operands cast to the weight dtype (bf16 by
    # default -> single MXU pass), accumulation forced to f32.
    w2 = w2_ref[...]                                                    # (H, H)
    pre2 = jnp.dot(w2, h1.astype(w2.dtype),
                   preferred_element_type=jnp.float32) + b2_ref[...]    # (H, TB) f32
    h2 = jnp.tanh(pre2)                                                 # (H, TB) f32

    # Layer 3: VPU broadcast multiply + XLU cross-sublane reduce (MXU stays free).
    y = jnp.sum(w3_ref[...] * h2, axis=0, keepdims=True) + b3_ref[0, 0]  # (1, TB)
    o_ref[...] = y.astype(o_ref.dtype)


def _round_up(v, m):
    return ((v + m - 1) // m) * m


def _round_down(v, m):
    return (v // m) * m


def measurement_net_2d(x, params, *, batch_tile=8192, use_bf16_matmul=True):
    """x: (B, 2) float32. params: w1,b1,w2,b2,w3,b3 stored (in_features, out_features)."""
    B, din = x.shape
    assert din == 2
    H = params["w1"].shape[1]

    # --- Tile selection -----------------------------------------------------
    b128 = _round_up(B, LANE)
    tb = _round_up(min(int(batch_tile), MAX_TB), LANE)
    tb = min(tb, b128)
    # v7x has 2 TensorCores: when the batch is large enough, keep >= 4 grid
    # steps on the "parallel" axis so both cores get work.
    quarter = _round_down(b128 // 4, LANE)
    if quarter >= LANE:
        tb = min(tb, quarter)
    Bp = _round_up(B, tb)
    grid = (Bp // tb,)

    # --- Wrapper-side layout plumbing (single transpose + lane-axis pad) -----
    x_t = x.T                                                     # (2, B)
    if Bp != B:
        x_t = jnp.pad(x_t, ((0, 0), (0, Bp - B)))                 # (2, Bp)

    dot_dtype = jnp.bfloat16 if use_bf16_matmul else x.dtype
    w1_t = params["w1"].T                                         # (H, 2)  f32
    b1_c = params["b1"].reshape(H, 1)                             # f32
    w2_t = params["w2"].T.astype(dot_dtype)                       # (H, H)  MXU operand
    b2_c = params["b2"].reshape(H, 1)                             # f32
    w3_c = params["w3"].reshape(H, 1)                             # (H, 1)  f32 (VPU)
    b3_s = params["b3"].reshape(1, 1)                             # SMEM scalar

    full = lambda shape: pl.BlockSpec(shape, lambda i: tuple(0 for _ in shape))

    cost = pl.CostEstimate(
        flops=2 * Bp * (2 * H + H * H + H),
        transcendentals=2 * Bp * H,
        bytes_accessed=4 * (3 * Bp + 3 * H + H * H + H + 1),
    )

    out_t = pl.pallas_call(
        _mlp_kernel,
        out_shape=jax.ShapeDtypeStruct((1, Bp), x.dtype),
        grid_spec=pltpu.PrefetchScalarGridSpec(
            num_scalar_prefetch=0,
            grid=grid,
            in_specs=[
                pl.BlockSpec((2, tb), lambda i: (0, i)),            # xᵀ tile
                full((H, 2)),                                       # w1ᵀ (grid-invariant)
                full((H, 1)),                                       # b1
                full((H, H)),                                       # w2ᵀ
                full((H, 1)),                                       # b2
                full((H, 1)),                                       # w3 column
                pl.BlockSpec(memory_space=pltpu.MemorySpace.SMEM),  # b3 scalar
            ],
            out_specs=pl.BlockSpec((1, tb), lambda i: (0, i)),      # lane-dense yᵀ
        ),
        compiler_params=pltpu.CompilerParams(
            dimension_semantics=("parallel",),      # shardable across v7x's 2 TCs
            vmem_limit_bytes=VMEM_LIMIT_BYTES,
        ),
        cost_estimate=cost,
    )(x_t, w1_t, b1_c, w2_t, b2_c, w3_c, b3_s)

    # Back to the PyTorch-facing (B, 1) layout; drop padded columns.
    return out_t[0, :B].reshape(B, 1)


def init_params(key, hidden_size=32):
    """Deterministic init mimicking PyTorch Linear default (U(-1/sqrt(fan_in), +))."""
    ks = jax.random.split(key, 6)

    def lin(kw, kb, fan_in, fan_out):
        bound = 1.0 / jnp.sqrt(fan_in)
        w = jax.random.uniform(kw, (fan_in, fan_out), jnp.float32, -bound, bound)
        b = jax.random.uniform(kb, (fan_out,), jnp.float32, -bound, bound)
        return w, b

    w1, b1 = lin(ks[0], ks[1], 2, hidden_size)
    w2, b2 = lin(ks[2], ks[3], hidden_size, hidden_size)
    w3, b3 = lin(ks[4], ks[5], hidden_size, 1)
    return {"w1": w1, "b1": b1, "w2": w2, "b2": b2, "w3": w3, "b3": b3}


def reference(x, p):
    h1 = jnp.tanh(x @ p["w1"] + p["b1"])
    h2 = jnp.tanh(h1 @ p["w2"] + p["b2"])
    return h2 @ p["w3"] + p["b3"]


if __name__ == "__main__":
    key = jax.random.PRNGKey(0)
    k_param, k_x = jax.random.split(key)

    hidden = 32
    batch = 300  # deliberately not a multiple of the tile -> exercises padding path
    params = init_params(k_param, hidden_size=hidden)
    x = jax.random.normal(k_x, (batch, 2), dtype=jnp.float32)

    ref = reference(x, params)

    # Default (fast) path: bf16 MXU operands, small tile here to exercise a
    # multi-step grid (128 -> 3 steps incl. padded tail).
    out = jax.block_until_ready(measurement_net_2d(x, params, batch_tile=128))
    assert out.shape == (batch, 1)
    assert jnp.allclose(out, ref, atol=3e-2, rtol=3e-2), float(
        jnp.max(jnp.abs(out - ref)))

    # Default tile selection (single step at this tiny batch).
    out_big = jax.block_until_ready(measurement_net_2d(x, params))
    assert jnp.allclose(out_big, ref, atol=3e-2, rtol=3e-2)

    # Strict f32 MXU path: tight tolerance against the reference.
    out_f32 = jax.block_until_ready(
        measurement_net_2d(x, params, batch_tile=128, use_bf16_matmul=False))
    assert jnp.allclose(out_f32, ref, atol=1e-4, rtol=1e-4), float(
        jnp.max(jnp.abs(out_f32 - ref)))

    print("KERNEL_OK")
</pallas_src>

<mosaic_0001>
module attributes {stable_mosaic.version = 11 : i64} {
  func.func @_mlp_kernel(%arg0: i32, %arg1: memref<2x128xf32, #tpu.memory_space<vmem>>, %arg2: memref<32x2xf32, #tpu.memory_space<vmem>>, %arg3: memref<32x1xf32, #tpu.memory_space<vmem>>, %arg4: memref<32x32xbf16, #tpu.memory_space<vmem>>, %arg5: memref<32x1xf32, #tpu.memory_space<vmem>>, %arg6: memref<32x1xf32, #tpu.memory_space<vmem>>, %arg7: memref<1x1xf32, #tpu.memory_space<smem>>, %arg8: memref<1x128xf32, #tpu.memory_space<vmem>>) attributes {dimension_semantics = [#tpu.dimension_semantics<parallel>], iteration_bounds = array<i64: 3>, scalar_prefetch = 0 : i64, scratch_operands = 0 : i64, tpu.core_type = #tpu.core_type<tc>, window_params = [{transform_indices = @transform_0, window_bounds = array<i64: 2, 128>}, {pipeline_mode = #tpu.pipeline_mode<synchronous>, transform_indices = @transform_1, window_bounds = array<i64: 32, 2>}, {pipeline_mode = #tpu.pipeline_mode<synchronous>, transform_indices = @transform_2, window_bounds = array<i64: 32, 1>}, {pipeline_mode = #tpu.pipeline_mode<synchronous>, transform_indices = @transform_3, window_bounds = array<i64: 32, 32>}, {pipeline_mode = #tpu.pipeline_mode<synchronous>, transform_indices = @transform_4, window_bounds = array<i64: 32, 1>}, {pipeline_mode = #tpu.pipeline_mode<synchronous>, transform_indices = @transform_5, window_bounds = array<i64: 32, 1>}, {transform_indices = @transform_6, window_bounds = array<i64: 1, 1>}, {transform_indices = @transform_7, window_bounds = array<i64: 1, 128>}]} {
    %c0 = arith.constant 0 : index
    %c0_0 = arith.constant 0 : index
    %0 = vector.load %arg1[%c0, %c0_0] : memref<2x128xf32, #tpu.memory_space<vmem>>, vector<1x128xf32>
    %c1 = arith.constant 1 : index
    %c0_1 = arith.constant 0 : index
    %1 = vector.load %arg1[%c1, %c0_1] : memref<2x128xf32, #tpu.memory_space<vmem>>, vector<1x128xf32>
    %c0_2 = arith.constant 0 : index
    %c0_3 = arith.constant 0 : index
    %2 = vector.load %arg2[%c0_2, %c0_3] : memref<32x2xf32, #tpu.memory_space<vmem>>, vector<32x2xf32>
    %3 = vector.extract_strided_slice %2 {offsets = [0, 0], sizes = [32, 1], strides = [1, 1]} : vector<32x2xf32> to vector<32x1xf32>
    %4 = vector.broadcast %3 : vector<32x1xf32> to vector<32x128xf32>
    %5 = vector.broadcast %0 : vector<1x128xf32> to vector<32x128xf32>
    %6 = arith.mulf %4, %5 : vector<32x128xf32>
    %7 = vector.extract_strided_slice %2 {offsets = [0, 1], sizes = [32, 1], strides = [1, 1]} : vector<32x2xf32> to vector<32x1xf32>
    %8 = vector.broadcast %7 : vector<32x1xf32> to vector<32x128xf32>
    %9 = vector.broadcast %1 : vector<1x128xf32> to vector<32x128xf32>
    %10 = arith.mulf %8, %9 : vector<32x128xf32>
    %11 = arith.addf %6, %10 : vector<32x128xf32>
    %c0_4 = arith.constant 0 : index
    %c0_5 = arith.constant 0 : index
    %12 = vector.load %arg3[%c0_4, %c0_5] : memref<32x1xf32, #tpu.memory_space<vmem>>, vector<32x1xf32>
    %13 = vector.broadcast %12 : vector<32x1xf32> to vector<32x128xf32>
    %14 = arith.addf %11, %13 : vector<32x128xf32>
    %15 = math.tanh %14 : vector<32x128xf32>
    %c0_6 = arith.constant 0 : index
    %c0_7 = arith.constant 0 : index
    %16 = vector.load %arg4[%c0_6, %c0_7] : memref<32x32xbf16, #tpu.memory_space<vmem>>, vector<32x32xbf16>
    %17 = arith.truncf %15 : vector<32x128xf32> to vector<32x128xbf16>
    %cst = arith.constant dense<0.000000e+00> : vector<32x128xf32>
    %18 = tpu.matmul %16, %17, %cst {dimension_numbers = #tpu.dot_dimension_numbers<[1], [0], [0], [1], [0, 0, 1, 1], [], []>} : vector<32x32xbf16>, vector<32x128xbf16>, vector<32x128xf32> -> vector<32x128xf32>
    %c0_8 = arith.constant 0 : index
    %c0_9 = arith.constant 0 : index
    %19 = vector.load %arg5[%c0_8, %c0_9] : memref<32x1xf32, #tpu.memory_space<vmem>>, vector<32x1xf32>
    %20 = vector.broadcast %19 : vector<32x1xf32> to vector<32x128xf32>
    %21 = arith.addf %18, %20 : vector<32x128xf32>
    %22 = math.tanh %21 : vector<32x128xf32>
    %c0_10 = arith.constant 0 : index
    %c0_11 = arith.constant 0 : index
    %23 = vector.load %arg6[%c0_10, %c0_11] : memref<32x1xf32, #tpu.memory_space<vmem>>, vector<32x1xf32>
    %24 = vector.broadcast %23 : vector<32x1xf32> to vector<32x128xf32>
    %25 = arith.mulf %24, %22 : vector<32x128xf32>
    %cst_12 = arith.constant dense<0.000000e+00> : vector<128xf32>
    %26 = vector.multi_reduction <add>, %25, %cst_12 [0] : vector<32x128xf32> to vector<128xf32>
    %27 = vector.shape_cast %26 : vector<128xf32> to vector<1x128xf32>
    %c0_13 = arith.constant 0 : index
    %c0_14 = arith.constant 0 : index
    %28 = memref.load %arg7[%c0_13, %c0_14] : memref<1x1xf32, #tpu.memory_space<smem>>
    %29 = vector.broadcast %28 : f32 to vector<1x128xf32>
    %30 = arith.addf %27, %29 : vector<1x128xf32>
    %c0_15 = arith.constant 0 : index
    %c0_16 = arith.constant 0 : index
    %31 = vector.load %arg8[%c0_15, %c0_16] : memref<1x128xf32, #tpu.memory_space<vmem>>, vector<1x128xf32>
    tpu.vector_store %arg8[%c0_15, %c0_16], %30 {strides = array<i32>} : memref<1x128xf32, #tpu.memory_space<vmem>>, vector<1x128xf32>,
    return
  }
  func.func @transform_0(%arg0: i32) -> (i32, i32) {
    %c0_i32 = arith.constant 0 : i32
    %c0_i32_0 = arith.constant 0 : i32
    return %c0_i32, %arg0 : i32, i32
  }
  func.func @transform_1(%arg0: i32) -> (i32, i32) {
    %c0_i32 = arith.constant 0 : i32
    %c0_i32_0 = arith.constant 0 : i32
    %c0_i32_1 = arith.constant 0 : i32
    return %c0_i32, %c0_i32_0 : i32, i32
  }
  func.func @transform_2(%arg0: i32) -> (i32, i32) {
    %c0_i32 = arith.constant 0 : i32
    %c0_i32_0 = arith.constant 0 : i32
    %c0_i32_1 = arith.constant 0 : i32
    return %c0_i32, %c0_i32_0 : i32, i32
  }
  func.func @transform_3(%arg0: i32) -> (i32, i32) {
    %c0_i32 = arith.constant 0 : i32
    %c0_i32_0 = arith.constant 0 : i32
    %c0_i32_1 = arith.constant 0 : i32
    return %c0_i32, %c0_i32_0 : i32, i32
  }
  func.func @transform_4(%arg0: i32) -> (i32, i32) {
    %c0_i32 = arith.constant 0 : i32
    %c0_i32_0 = arith.constant 0 : i32
    %c0_i32_1 = arith.constant 0 : i32
    return %c0_i32, %c0_i32_0 : i32, i32
  }
  func.func @transform_5(%arg0: i32) -> (i32, i32) {
    %c0_i32 = arith.constant 0 : i32
    %c0_i32_0 = arith.constant 0 : i32
    %c0_i32_1 = arith.constant 0 : i32
    return %c0_i32, %c0_i32_0 : i32, i32
  }
  func.func @transform_6(%arg0: i32) -> (i32, i32) {
    %c0_i32 = arith.constant 0 : i32
    %c0_i32_0 = arith.constant 0 : i32
    %c0_i32_1 = arith.constant 0 : i32
    return %c0_i32, %c0_i32_0 : i32, i32
  }
  func.func @transform_7(%arg0: i32) -> (i32, i32) {
    %c0_i32 = arith.constant 0 : i32
    %c0_i32_0 = arith.constant 0 : i32
    return %c0_i32, %arg0 : i32, i32
  }
}

</mosaic_0001>

<llo_original>
// kernel: tpu_custom_call.1
$region0: #{tpu_custom_call.1}
  #allocation0 [shape = 'u32[]', space=smem, size = 0x4, offset = 0x4, fixed_abs, tag = 'smem constant byte address 0x4 - core index']
  #allocation1 [shape = 'u32[144,128]{1,0:T(1,128)}', space=vmem, size = 0x12000, scoped, tag = 'internal scratch']
  #allocation2 [shape = 'f32[1,1]{1,0:T(1,128)S(6)}', space=smem, size = 0x200, scoped, tag = 'scoped memory for tpu_custom_call.1']
  %s0 = inlined_call_operand.vmem [shape: f32[2,384], index: 0, kind: input, shape index: {}]
  %s1 = inlined_call_operand.vmem [shape: f32[32,2], index: 1, kind: input, shape index: {}]
  %s2 = inlined_call_operand.vmem [shape: f32[32,1], index: 2, kind: input, shape index: {}]
  %s3 = inlined_call_operand.vmem [shape: bf16[32,32], index: 3, kind: input, shape index: {}]
  %s4 = inlined_call_operand.vmem [shape: f32[32,1], index: 4, kind: input, shape index: {}]
  %s5 = inlined_call_operand.vmem [shape: f32[32,1], index: 5, kind: input, shape index: {}]
  %s6 = inlined_call_operand.<no memory space> [shape: f32[1,1], index: 6, kind: input, shape index: {}]
  %s7 = inlined_call_operand.hbm [shape: f32[1,384], index: 7, kind: output, shape index: {}]
  %s8 = sld [smem:[#allocation0]]
  $region61: #{tpu_custom_call.1} parent=0
    _
  %s10 = ssub.s32 1, %s8
  %s11 = scalar_select 0, %s10, %s8
  %12 = sst [smem:[#allocation2]] %s6
  $region1: #{tpu_custom_call.1} parent=0
    #allocation3 [shape = 'u8[1024]{0}', space=vmem, size = 0x400, scoped, tag = 'output window, operand 0']
    #allocation4 [shape = 's32[2]{0}', space=sflag, size = 0x8, scoped, tag = 'scoped memory for tpu_custom_call.1']
    %13 = vsyncpa [#allocation4], 0
    %s14 = scalar_lea.sflag [#allocation4], 1
    %15 = vsyncpa %s14, 0
    loop: start=0, step=1, limit=5
    $region2: #{tpu_custom_call.1} parent=1 // loop_pre_header
      _
    $region3: #{tpu_custom_call.1} parent=1 // loop_header
      %s17 = sphi 0, %s21
      %p18 = scmp.ge.s32.totalorder %s17, 5
      %s27 = sphi 0, %s29
      %s30 = sphi 0, %s27
      %s31 = sphi 0, %s30
      %s47 = sphi 0, %s31
      %s51 = sphi 0, %s51
      %s53 = sphi 0, %s51
      %s54 = sphi 0, %s53
      %s68 = sphi 0, %s54
      %s72 = sphi 0, %s72
      %s74 = sphi 0, %s72
      %s75 = sphi 0, %s74
      %s89 = sphi 0, %s75
      %s93 = sphi 0, %s93
      %s95 = sphi 0, %s93
      %s96 = sphi 0, %s95
      %s110 = sphi 0, %s96
      %s114 = sphi 0, %s114
      %s116 = sphi 0, %s114
      %s117 = sphi 0, %s116
      %s131 = sphi 0, %s117
      %s135 = sphi 0, %s135
      %s137 = sphi 0, %s135
      %s138 = sphi 0, %s137
      %s152 = sphi 0, %s138
      %s156 = sphi 0, %s156
      %s158 = sphi 0, %s156
      %s159 = sphi 0, %s158
      %s173 = sphi 0, %s159
      %s179 = sphi 0, %s181
      %s182 = sphi 0, %s179
      %s183 = sphi 0, %s182
      %s199 = sphi 0, %s183
    $region4: #{tpu_custom_call.1} parent=1 // loop_header_branch
      %20 = sbr.rel (%p18) target = $region8
    $region5: #{tpu_custom_call.1} parent=1 // loop_body
      %s22 = ssub.s32 %s17, 1
      %s23 = ssub.s32 %s17, 2
      %s24 = sadd.s32 %s17, 1
      %s25 = ssub.s32 %s17, %s24
      %p26 = scmp.eq.s32.totalorder %s25, 0
      %s28 = sadd.s32 %s27, 1
      %s29 = scalar_select %p26, %s27, %s28
      %p32 = pneg %p26
      %p33 = scmp.eq.s32.totalorder %s17, 2
      %p34 = por %p32, %p33
      %p35 = scmp.ne.s32.totalorder %s27, %s30
      %p36 = scmp.eq.s32.totalorder %s17, 0
      %p37 = por %p35, %p36
      %p38 = scmp.ne.s32.totalorder %s27, %s30
      %p39 = scmp.eq.s32.totalorder %s22, 2
      %p40 = por %p38, %p39
      %p41 = scmp.ne.s32.totalorder %s30, %s31
      %p42 = scmp.eq.s32.totalorder %s22, 0
      %p43 = por %p41, %p42
      %p44 = scmp.ne.s32.totalorder %s30, %s31
      %p45 = scmp.eq.s32.totalorder %s23, 2
      %p46 = por %p44, %p45
      %p48 = scmp.ne.s32.totalorder %s31, %s47
      %p49 = scmp.eq.s32.totalorder %s23, 0
      %p50 = por %p48, %p49
      %s52 = sadd.s32 %s51, 1
      %p55 = scmp.eq.s32.totalorder %s17, 2
      %p56 = scmp.ne.s32.totalorder %s51, %s53
      %p57 = scmp.eq.s32.totalorder %s17, 0
      %p58 = por %p56, %p57
      %p59 = scmp.ne.s32.totalorder %s51, %s53
      %p60 = scmp.eq.s32.totalorder %s22, 2
      %p61 = por %p59, %p60
      %p62 = scmp.ne.s32.totalorder %s53, %s54
      %p63 = scmp.eq.s32.totalorder %s22, 0
      %p64 = por %p62, %p63
      %p65 = scmp.ne.s32.totalorder %s53, %s54
      %p66 = scmp.eq.s32.totalorder %s23, 2
      %p67 = por %p65, %p66
      %p69 = scmp.ne.s32.totalorder %s54, %s68
      %p70 = scmp.eq.s32.totalorder %s23, 0
      %p71 = por %p69, %p70
      %s73 = sadd.s32 %s72, 1
      %p76 = scmp.eq.s32.totalorder %s17, 2
      %p77 = scmp.ne.s32.totalorder %s72, %s74
      %p78 = scmp.eq.s32.totalorder %s17, 0
      %p79 = por %p77, %p78
      %p80 = scmp.ne.s32.totalorder %s72, %s74
      %p81 = scmp.eq.s32.totalorder %s22, 2
      %p82 = por %p80, %p81
      %p83 = scmp.ne.s32.totalorder %s74, %s75
      %p84 = scmp.eq.s32.totalorder %s22, 0
      %p85 = por %p83, %p84
      %p86 = scmp.ne.s32.totalorder %s74, %s75
      %p87 = scmp.eq.s32.totalorder %s23, 2
      %p88 = por %p86, %p87
      %p90 = scmp.ne.s32.totalorder %s75, %s89
      %p91 = scmp.eq.s32.totalorder %s23, 0
      %p92 = por %p90, %p91
      %s94 = sadd.s32 %s93, 1
      %p97 = scmp.eq.s32.totalorder %s17, 2
      %p98 = scmp.ne.s32.totalorder %s93, %s95
      %p99 = scmp.eq.s32.totalorder %s17, 0
      %p100 = por %p98, %p99
      %p101 = scmp.ne.s32.totalorder %s93, %s95
      %p102 = scmp.eq.s32.totalorder %s22, 2
      %p103 = por %p101, %p102
      %p104 = scmp.ne.s32.totalorder %s95, %s96
      %p105 = scmp.eq.s32.totalorder %s22, 0
      %p106 = por %p104, %p105
      %p107 = scmp.ne.s32.totalorder %s95, %s96
      %p108 = scmp.eq.s32.totalorder %s23, 2
      %p109 = por %p107, %p108
      %p111 = scmp.ne.s32.totalorder %s96, %s110
      %p112 = scmp.eq.s32.totalorder %s23, 0
      %p113 = por %p111, %p112
      %s115 = sadd.s32 %s114, 1
      %p118 = scmp.eq.s32.totalorder %s17, 2
      %p119 = scmp.ne.s32.totalorder %s114, %s116
      %p120 = scmp.eq.s32.totalorder %s17, 0
      %p121 = por %p119, %p120
      %p122 = scmp.ne.s32.totalorder %s114, %s116
      %p123 = scmp.eq.s32.totalorder %s22, 2
      %p124 = por %p122, %p123
      %p125 = scmp.ne.s32.totalorder %s116, %s117
      %p126 = scmp.eq.s32.totalorder %s22, 0
      %p127 = por %p125, %p126
      %p128 = scmp.ne.s32.totalorder %s116, %s117
      %p129 = scmp.eq.s32.totalorder %s23, 2
      %p130 = por %p128, %p129
      %p132 = scmp.ne.s32.totalorder %s117, %s131
      %p133 = scmp.eq.s32.totalorder %s23, 0
      %p134 = por %p132, %p133
      %s136 = sadd.s32 %s135, 1
      %p139 = scmp.eq.s32.totalorder %s17, 2
      %p140 = scmp.ne.s32.totalorder %s135, %s137
      %p141 = scmp.eq.s32.totalorder %s17, 0
      %p142 = por %p140, %p141
      %p143 = scmp.ne.s32.totalorder %s135, %s137
      %p144 = scmp.eq.s32.totalorder %s22, 2
      %p145 = por %p143, %p144
      %p146 = scmp.ne.s32.totalorder %s137, %s138
      %p147 = scmp.eq.s32.totalorder %s22, 0
      %p148 = por %p146, %p147
      %p149 = scmp.ne.s32.totalorder %s137, %s138
      %p150 = scmp.eq.s32.totalorder %s23, 2
      %p151 = por %p149, %p150
      %p153 = scmp.ne.s32.totalorder %s138, %s152
      %p154 = scmp.eq.s32.totalorder %s23, 0
      %p155 = por %p153, %p154
      %s157 = sadd.s32 %s156, 1
      %p160 = scmp.eq.s32.totalorder %s17, 2
      %p161 = scmp.ne.s32.totalorder %s156, %s158
      %p162 = scmp.eq.s32.totalorder %s17, 0
      %p163 = por %p161, %p162
      %p164 = scmp.ne.s32.totalorder %s156, %s158
      %p165 = scmp.eq.s32.totalorder %s22, 2
      %p166 = por %p164, %p165
      %p167 = scmp.ne.s32.totalorder %s158, %s159
      %p168 = scmp.eq.s32.totalorder %s22, 0
      %p169 = por %p167, %p168
      %p170 = scmp.ne.s32.totalorder %s158, %s159
      %p171 = scmp.eq.s32.totalorder %s23, 2
      %p172 = por %p170, %p171
      %p174 = scmp.ne.s32.totalorder %s159, %s173
      %p175 = scmp.eq.s32.totalorder %s23, 0
      %p176 = por %p174, %p175
      %s177 = ssub.s32 %s17, %s24
      %p178 = scmp.eq.s32.totalorder %s177, 0
      %s180 = sadd.s32 %s179, 1
      %s181 = scalar_select %p178, %s179, %s180
      %p184 = pneg %p178
      %p185 = scmp.eq.s32.totalorder %s17, 2
      %p186 = por %p184, %p185
      %p187 = scmp.ne.s32.totalorder %s179, %s182
      %p188 = scmp.eq.s32.totalorder %s17, 0
      %p189 = por %p187, %p188
      %p190 = scmp.ne.s32.totalorder %s179, %s182
      %p191 = scmp.eq.s32.totalorder %s22, 2
      %p192 = por %p190, %p191
      %p193 = scmp.ne.s32.totalorder %s182, %s183
      %p194 = scmp.eq.s32.totalorder %s22, 0
      %p195 = por %p193, %p194
      %p196 = scmp.ne.s32.totalorder %s182, %s183
      %p197 = scmp.eq.s32.totalorder %s23, 2
      %p198 = por %p196, %p197
      %p200 = scmp.ne.s32.totalorder %s183, %s199
      %p201 = scmp.eq.s32.totalorder %s23, 0
      %p202 = por %p200, %p201
      %p203 = scmp.le.s32.totalorder 1, %s17
      %p204 = scmp.lt.s32.totalorder %s17, 4
      %p205 = pnand %p203, %p204
      %p206 = pneg %p205
      // Predicated region
      $region9: #{tpu_custom_call.1} parent=5 // pred_check
        _
      $region10: #{tpu_custom_call.1} parent=5 // pred_check_branch
        %208 = sbr.rel (%p205) target = $region12
      $region11: #{tpu_custom_call.1} parent=5 // pred_region
        %s209 = ssub.s32 %s17, 1
        // Predicated region
        $region13: #{tpu_custom_call.1} parent=11 // pred_check
          %p210 = pneg %p64
        $region14: #{tpu_custom_call.1} parent=11 // pred_check_branch
          %212 = sbr.rel (%p210) target = $region16
        $region15: #{tpu_custom_call.1} parent=11 // pred_region
          _
        $region16: #{tpu_custom_call.1} parent=11 // pred_fallthru
          _
        // Predicated region
        $region17: #{tpu_custom_call.1} parent=11 // pred_check
          %p213 = pneg %p85
        $region18: #{tpu_custom_call.1} parent=11 // pred_check_branch
          %215 = sbr.rel (%p213) target = $region20
        $region19: #{tpu_custom_call.1} parent=11 // pred_region
          _
        $region20: #{tpu_custom_call.1} parent=11 // pred_fallthru
          _
        // Predicated region
        $region21: #{tpu_custom_call.1} parent=11 // pred_check
          %p216 = pneg %p106
        $region22: #{tpu_custom_call.1} parent=11 // pred_check_branch
          %218 = sbr.rel (%p216) target = $region24
        $region23: #{tpu_custom_call.1} parent=11 // pred_region
          _
        $region24: #{tpu_custom_call.1} parent=11 // pred_fallthru
          _
        // Predicated region
        $region25: #{tpu_custom_call.1} parent=11 // pred_check
          %p219 = pneg %p127
        $region26: #{tpu_custom_call.1} parent=11 // pred_check_branch
          %221 = sbr.rel (%p219) target = $region28
        $region27: #{tpu_custom_call.1} parent=11 // pred_region
          _
        $region28: #{tpu_custom_call.1} parent=11 // pred_fallthru
          _
        // Predicated region
        $region29: #{tpu_custom_call.1} parent=11 // pred_check
          %p222 = pneg %p148
        $region30: #{tpu_custom_call.1} parent=11 // pred_check_branch
          %224 = sbr.rel (%p222) target = $region32
        $region31: #{tpu_custom_call.1} parent=11 // pred_region
          _
        $region32: #{tpu_custom_call.1} parent=11 // pred_fallthru
          _
        // Predicated region
        $region33: #{tpu_custom_call.1} parent=11 // pred_check
          %p225 = pneg %p169
        $region34: #{tpu_custom_call.1} parent=11 // pred_check_branch
          %227 = sbr.rel (%p225) target = $region36
        $region35: #{tpu_custom_call.1} parent=11 // pred_region
          _
        $region36: #{tpu_custom_call.1} parent=11 // pred_fallthru
          _
      $region12: #{tpu_custom_call.1} parent=5 // pred_fallthru
        _
      %p228 = scmp.lt.s32.totalorder %s17, 3
      // Predicated region
      $region37: #{tpu_custom_call.1} parent=5 // pred_check
        %p229 = pneg %p228
      $region38: #{tpu_custom_call.1} parent=5 // pred_check_branch
        %231 = sbr.rel (%p229) target = $region40
      $region39: #{tpu_custom_call.1} parent=5 // pred_region
        // Predicated region
        $region41: #{tpu_custom_call.1} parent=39 // pred_check
          %p232 = pneg %p37
        $region42: #{tpu_custom_call.1} parent=39 // pred_check_branch
          %234 = sbr.rel (%p232) target = $region44
        $region43: #{tpu_custom_call.1} parent=39 // pred_region
          %p235 = scmp.lt.s32.totalorder %s17, 2
          %s236 = scalar_select %p235, %s17, 2
          %s237 = smul.addr %s236, 2
          %s238 = scalar_lea.vmem %s0, %s237
        $region44: #{tpu_custom_call.1} parent=39 // pred_fallthru
          _
      $region40: #{tpu_custom_call.1} parent=5 // pred_fallthru
        _
      %p239 = scmp.le.s32.totalorder 1, %s17
      %p240 = scmp.lt.s32.totalorder %s17, 4
      %p241 = pnand %p239, %p240
      %p242 = pneg %p241
      // Predicated region
      $region45: #{tpu_custom_call.1} parent=5 // pred_check
        _
      $region46: #{tpu_custom_call.1} parent=5 // pred_check_branch
        %244 = sbr.rel (%p241) target = $region48
      $region47: #{tpu_custom_call.1} parent=5 // pred_region
        %s245 = ssub.s32 %s17, 1
        %p246 = scmp.lt.s32.totalorder %s22, 2
        %s247 = scalar_select %p246, %s22, 2
        %s248 = smul.addr %s247, 2
        %s249 = scalar_lea.vmem %s0, %s248
        %p250 = pneg %p43
        %p251 = pneg %p40
        %p252 = pneg %p64
        %p253 = pneg %p61
        %p254 = pneg %p85
        %p255 = pneg %p82
        %p256 = pneg %p106
        %p257 = pneg %p103
        %p258 = pneg %p127
        %p259 = pneg %p124
        %p260 = pneg %p148
        %p261 = pneg %p145
        %p262 = pneg %p169
        %p263 = pneg %p166
        %p264 = pneg %p195
        %p265 = pneg %p192
        %s266 = sand.u32 %s182, 1
        %s267 = scalar_lea.sflag [#allocation4], %s266
        %s268 = sand.u32 %s182, 1
        %s269 = scalar_lea.vmem [#allocation3], %s268
        %p270 = scmp.lt.s32.totalorder %s22, 2
        %s271 = scalar_select %p270, %s22, 2
        %s272 = smul.addr %s271, 2
        %s273 = scalar_lea.vmem %s0, %s272
        %v275 = vld [vmem:[%s273] sm:$0x1]
        %v276 = vld [vmem:[%s273 + $0x1] sm:$0x1]
        %v277 = vld [vmem:[%s1] sm:$0xff]
        %v278 = vld [vmem:[%s1 + $0x8] sm:$0xff]
        %v279 = vld [vmem:[%s1 + $0x10] sm:$0xff]
        %v280 = vld [vmem:[%s1 + $0x18] sm:$0xff]
        %282 = vset.pattern.permute.xlu0 0
        %283 = vperm.xlu0 %282, %v277
        %v284 = vpop.permute.xlu0 %283
        %287 = vset.pattern.permute.xlu0 0
        %288 = vperm.xlu0 %287, %v278
        %v289 = vpop.permute.xlu0 %288
        %292 = vset.pattern.permute.xlu0 0
        %293 = vperm.xlu0 %292, %v279
        %v294 = vpop.permute.xlu0 %293
        %297 = vset.pattern.permute.xlu0 0
        %298 = vperm.xlu0 %297, %v280
        %v299 = vpop.permute.xlu0 %298
        %v301 = vlaneseq
        %v302 = vshrl.u32 %v301, 7
        %v303 = vsub.s32 0, %v302
        %v304 = vrot.slane %v275, %v303
        %v305 = vmul.f32 %v284, %v304
        %v306 = vmul.f32 %v289, %v304
        %v307 = vmul.f32 %v294, %v304
        %v308 = vmul.f32 %v299, %v304
        %309 = vset.pattern.permute.xlu0 1
        %310 = vperm.xlu0 %309, %v277
        %v311 = vpop.permute.xlu0 %310
        %313 = vset.pattern.permute.xlu0 1
        %314 = vperm.xlu0 %313, %v278
        %v315 = vpop.permute.xlu0 %314
        %317 = vset.pattern.permute.xlu0 1
        %318 = vperm.xlu0 %317, %v279
        %v319 = vpop.permute.xlu0 %318
        %321 = vset.pattern.permute.xlu0 1
        %322 = vperm.xlu0 %321, %v280
        %v323 = vpop.permute.xlu0 %322
        %v325 = vlaneseq
        %v326 = vshrl.u32 %v325, 7
        %v327 = vsub.s32 0, %v326
        %v328 = vrot.slane %v276, %v327
        %v329 = vmul.f32 %v311, %v328
        %v330 = vmul.f32 %v315, %v328
        %v331 = vmul.f32 %v319, %v328
        %v332 = vmul.f32 %v323, %v328
        %v333 = vadd.f32 %v305, %v329
        %v334 = vadd.f32 %v306, %v330
        %v335 = vadd.f32 %v307, %v331
        %v336 = vadd.f32 %v308, %v332
        %v337 = vld [vmem:[%s2] sm:$0xff]
        %v338 = vld [vmem:[%s2 + $0x8] sm:$0xff]
        %v339 = vld [vmem:[%s2 + $0x10] sm:$0xff]
        %v340 = vld [vmem:[%s2 + $0x18] sm:$0xff]
        %342 = vset.pattern.permute.xlu0 0
        %343 = vperm.xlu0 %342, %v337
        %v344 = vpop.permute.xlu0 %343
        %347 = vset.pattern.permute.xlu0 0
        %348 = vperm.xlu0 %347, %v338
        %v349 = vpop.permute.xlu0 %348
        %352 = vset.pattern.permute.xlu0 0
        %353 = vperm.xlu0 %352, %v339
        %v354 = vpop.permute.xlu0 %353
        %357 = vset.pattern.permute.xlu0 0
        %358 = vperm.xlu0 %357, %v340
        %v359 = vpop.permute.xlu0 %358
        %v361 = vadd.f32 %v333, %v344
        %v362 = vadd.f32 %v334, %v349
        %v363 = vadd.f32 %v335, %v354
        %v364 = vadd.f32 %v336, %v359
        %v365 = vtanh.pop %v361
        %v366 = vtanh.pop %v362
        %v367 = vtanh.pop %v363
        %v368 = vtanh.pop %v364
        %v369 = vld [vmem:[%s3] sm:$0xf]
        %v370 = vld [vmem:[%s3 + $0x4] sm:$0xf]
        %v371 = vld [vmem:[%s3 + $0x8] sm:$0xf]
        %v372 = vld [vmem:[%s3 + $0xc] sm:$0xf]
        %v373 = vpack.c.bf16 %v366, %v365
        %v374 = vpack.c.bf16 %v368, %v367
        %v375 = vld [vmem:[%s4] sm:$0xff]
        %v376 = vld [vmem:[%s4 + $0x8] sm:$0xff]
        %v377 = vld [vmem:[%s4 + $0x10] sm:$0xff]
        %v378 = vld [vmem:[%s4 + $0x18] sm:$0xff]
        %380 = vset.pattern.permute.xlu0 0
        %381 = vperm.xlu0 %380, %v375
        %v382 = vpop.permute.xlu0 %381
        %385 = vset.pattern.permute.xlu0 0
        %386 = vperm.xlu0 %385, %v376
        %v387 = vpop.permute.xlu0 %386
        %390 = vset.pattern.permute.xlu0 0
        %391 = vperm.xlu0 %390, %v377
        %v392 = vpop.permute.xlu0 %391
        %395 = vset.pattern.permute.xlu0 0
        %396 = vperm.xlu0 %395, %v378
        %v397 = vpop.permute.xlu0 %396
        %v403 = vunpack.c.l.b16 %v369
        %v404 = vunpack.c.l.b16 %v370
        %v405 = vunpack.c.l.b16 %v371
        %v406 = vunpack.c.l.b16 %v372
        %v407 = vpack.c.b16 %v404, %v403
        %v408 = vpack.c.b16 %v406, %v405
        %vm409 = vcmask 261120
        %v411 = vsel %vm409, %v407, 0
        %v414 = vsel %vm409, %v408, 0
        %416 = vmatprep.subr.bf16.mxu0 0
        %417 = vmatpush1.bf16.msra.mxu0 %v373
        %418 = vmatprep.subr.bf16.mxu0 0
        %419 = vmatpush1.bf16.msra.mxu0 %v374
        %420 = vmatprep.subr.bf16.mxu0 0
        %421 = vmatpush1.bf16.msra.mxu0 0
        %422 = vmatprep.subr.bf16.mxu0 0
        %423 = vmatpush1.bf16.msra.mxu0 0
        %424 = vmatprep.subr.bf16.mxu0 0
        %425 = vmatpush1.bf16.msra.mxu0 0
        %426 = vmatprep.subr.bf16.mxu0 0
        %427 = vmatpush1.bf16.msra.mxu0 0
        %428 = vmatprep.subr.bf16.mxu0 0
        %429 = vmatpush1.bf16.msra.mxu0 0
        %430 = vmatprep.subr.bf16.mxu0 0
        %431 = vmatpush1.bf16.msra.mxu0 0
        %432 = vmatprep.subr.bf16.mxu0 0
        %433 = vmatpush1.bf16.msra.mxu0 0
        %434 = vmatprep.subr.bf16.mxu0 0
        %435 = vmatpush1.bf16.msra.mxu0 0
        %436 = vmatprep.subr.bf16.mxu0 0
        %437 = vmatpush1.bf16.msra.mxu0 0
        %438 = vmatprep.subr.bf16.mxu0 0
        %439 = vmatpush1.bf16.msra.mxu0 0
        %440 = vmatprep.subr.bf16.mxu0 0
        %441 = vmatpush1.bf16.msra.mxu0 0
        %442 = vmatprep.subr.bf16.mxu0 0
        %443 = vmatpush1.bf16.msra.mxu0 0
        %444 = vmatprep.subr.bf16.mxu0 0
        %445 = vmatpush1.bf16.msra.mxu0 0
        %446 = vmatprep.subr.bf16.mxu0 0
        %447 = vmatpush1.bf16.msra.mxu0 0
        %448 = vmatprep.mubr.bf16.mxu0 0
        %449 = vmatmul.mubr.bf16.gmra.mrb[0].mxu0 %v411
        %v450 = vpop.f32.mrb[0].mxu0
        %v451 = vadd.f32 %v382, %v450
        %v452 = vpop.f32.mrb[0].mxu0
        %v453 = vpop.f32.mrb[0].mxu0
        %v454 = vadd.f32 %v387, %v453
        %v455 = vpop.f32.mrb[0].mxu0
        %456 = vmatprep.mubr.bf16.mxu0 0
        %457 = vmatmul.mubr.bf16.gmra.mrb[0].mxu0 %v414
        %v458 = vpop.f32.mrb[0].mxu0
        %v459 = vadd.f32 %v392, %v458
        %v460 = vpop.f32.mrb[0].mxu0
        %v461 = vpop.f32.mrb[0].mxu0
        %v462 = vadd.f32 %v397, %v461
        %v463 = vpop.f32.mrb[0].mxu0
        %464 = vdwg.mxu0
        %v465 = vtanh.pop %v451
        %v466 = vtanh.pop %v454
        %v467 = vtanh.pop %v459
        %v468 = vtanh.pop %v462
        %v469 = vld [vmem:[%s5] sm:$0xff]
        %v470 = vld [vmem:[%s5 + $0x8] sm:$0xff]
        %v471 = vld [vmem:[%s5 + $0x10] sm:$0xff]
        %v472 = vld [vmem:[%s5 + $0x18] sm:$0xff]
        %474 = vset.pattern.permute.xlu0 0
        %475 = vperm.xlu0 %474, %v469
        %v476 = vpop.permute.xlu0 %475
        %479 = vset.pattern.permute.xlu0 0
        %480 = vperm.xlu0 %479, %v470
        %v481 = vpop.permute.xlu0 %480
        %484 = vset.pattern.permute.xlu0 0
        %485 = vperm.xlu0 %484, %v471
        %v486 = vpop.permute.xlu0 %485
        %489 = vset.pattern.permute.xlu0 0
        %490 = vperm.xlu0 %489, %v472
        %v491 = vpop.permute.xlu0 %490
        %v493 = vmul.f32 %v476, %v465
        %v494 = vmul.f32 %v481, %v466
        %v495 = vmul.f32 %v486, %v467
        %v496 = vmul.f32 %v491, %v468
        %v497 = vadd.f32 %v493, %v494
        %v498 = vadd.f32 %v497, %v495
        %v499 = vadd.f32 %v498, %v496
        %v500 = vrot.slane %v499, 4
        %v501 = vadd.f32 %v499, %v500
        %v502 = vrot.slane %v501, 2
        %v503 = vadd.f32 %v501, %v502
        %v504 = vrot.slane %v503, 1
        %v505 = vadd.f32 %v503, %v504
        %s506 = sld [smem:[#allocation2]]
        %v507 = vstv %s506
        %v508 = vadd.f32 %v505, %v507
        %509 = vst [vmem:[%s269] sm:$0x1] %v508
        %s510 = sand.u32 %s182, 1
        %s511 = scalar_lea.sflag [#allocation4], %s510
        %s512 = sand.u32 %s182, 1
        %s513 = scalar_lea.vmem [#allocation3], %s512
        // Predicated region
        $region49: #{tpu_custom_call.1} parent=47 // pred_check
          %p514 = pneg %p192
        $region50: #{tpu_custom_call.1} parent=47 // pred_check_branch
          %516 = sbr.rel (%p514) target = $region52
        $region51: #{tpu_custom_call.1} parent=47 // pred_region
          %s518 = ssub.s32 16, 16
          %519 = vsyncadd %s511, %s518
          %s520 = smul.addr %s22, 16
          %s521 = scalar_lea.hbm %s7, %s520
          %s523 = sshll.u32 %s513, 4
          %s524 = int_to_ptr.vmem [resolvable:$true] %s523
          %526 = dma.vmem_to_hbm [thread:$0]  %s524, 16, %s521, %s511
        $region52: #{tpu_custom_call.1} parent=47 // pred_fallthru
          _
      $region48: #{tpu_custom_call.1} parent=5 // pred_fallthru
        _
      %p527 = scmp.le.s32.totalorder 2, %s17
      // Predicated region
      $region53: #{tpu_custom_call.1} parent=5 // pred_check
        %p528 = pneg %p527
      $region54: #{tpu_custom_call.1} parent=5 // pred_check_branch
        %530 = sbr.rel (%p528) target = $region56
      $region55: #{tpu_custom_call.1} parent=5 // pred_region
        %s531 = ssub.s32 %s17, 2
        // Predicated region
        $region57: #{tpu_custom_call.1} parent=55 // pred_check
          %p532 = pneg %p198
        $region58: #{tpu_custom_call.1} parent=55 // pred_check_branch
          %534 = sbr.rel (%p532) target = $region60
        $region59: #{tpu_custom_call.1} parent=55 // pred_region
          %s535 = sand.u32 %s183, 1
          %s536 = scalar_lea.sflag [#allocation4], %s535
          %s537 = sand.u32 %s183, 1
          %s538 = scalar_lea.vmem [#allocation3], %s537
          %539 = dma.done %s536, 16
        $region60: #{tpu_custom_call.1} parent=55 // pred_fallthru
          _
      $region56: #{tpu_custom_call.1} parent=5 // pred_fallthru
        _
    $region6: #{tpu_custom_call.1} parent=1 // loop_footer
      %s21 = sadd.s32 1, %s17
    $region7: #{tpu_custom_call.1} parent=1 // loop_footer_branch
      %16 = sbr.rel target = $region3
    $region8: #{tpu_custom_call.1} parent=1 // loop_exit
      _
    %540 = vsyncpa [#allocation4], 1
    %s541 = scalar_lea.sflag [#allocation4], 1
    %542 = vsyncpa %s541, 1

</llo_original>
